<compile_context>
chip_gen: v7x
topology: tpu7x:2x2x1
jax: 0.10.0
libtpu: 0.0.40
codegen_flags: <defaults>
</compile_context>

<pallas_src>
import functools

import jax
import jax.numpy as jnp
from jax.experimental import pallas as pl
from jax.experimental.pallas import tpu as pltpu


# ---------------------------------------------------------------------------
# Kernel
# ---------------------------------------------------------------------------
def _gemv_kernel(alpha_ref, beta_ref, a_ref, x_ref, b_ref, o_ref, acc_ref, *,
                 k_valid_last):
    # alpha/beta: (1,) SMEM scalars.
    # a_ref: (tm, tk) VMEM tile of A.
    # x_ref: (1, tk) lane-dense slice of x.
    # b_ref / o_ref / acc_ref: (tm, 1).
    k = pl.program_id(1)
    nk = pl.num_programs(1)

    @pl.when(k == 0)
    def _():
        acc_ref[...] = jnp.zeros_like(acc_ref)

    # VPU broadcast multiply + lane reduce (no MXU: keeps A streaming at HBM
    # rate and avoids the f32 multi-pass matmul penalty).
    prod = a_ref[...] * x_ref[...]                       # (tm, tk)
    if k_valid_last is not None:
        # Static: the last K tile is ragged -> zero out-of-bounds lanes.
        lane = jax.lax.broadcasted_iota(jnp.int32, prod.shape, dimension=1)
        limit = jnp.where(k == nk - 1, k_valid_last, prod.shape[1])
        prod = jnp.where(lane < limit, prod, 0.0)
    acc_ref[...] += jnp.sum(prod, axis=-1, keepdims=True)

    @pl.when(k == nk - 1)
    def _():
        o_ref[...] = (alpha_ref[0] * acc_ref[...]
                      + beta_ref[0] * b_ref[...]).astype(o_ref.dtype)


# ---------------------------------------------------------------------------
# Tiling
# ---------------------------------------------------------------------------
def _round_up(x, m):
    return -(-x // m) * m


def _vmem_capacity_bytes():
    try:
        info = pltpu.get_tpu_info()
        cap = getattr(info, "vmem_capacity_bytes", None)
        if cap:
            return int(cap)
    except Exception:
        pass
    return 64 << 20  # conservative (v7x-class) fallback


def _choose_tiles(rows, cols, itemsize=4):
    """Pick (tm, tk, vmem_limit) from a generation-aware, padded-byte budget."""
    vmem_cap = _vmem_capacity_bytes()
    if vmem_cap <= (64 << 20):          # v7x-class: 64 MiB physical per TC
        vmem_limit = 52 << 20
    else:                               # v5e / v6e: 128 MiB
        vmem_limit = 100 << 20
    usable = int(vmem_limit * 0.75)     # headroom for compiler temporaries/DMA

    cols_p = _round_up(cols, 128)
    rows_p8 = _round_up(rows, 8)
    # Per-row padded VMEM cost of the small (tm, 1) buffers (b x2, out x2, acc),
    # each lane-padded to 128.
    small_per_row = 5 * 128 * itemsize

    # A accounting: double-buffered tile (2x) + product temporary (~1x).
    full_per_row = 3 * cols_p * itemsize + small_per_row
    if usable // full_per_row >= 256:
        # Full-width K tile (block equal to the full cols dim is always legal).
        tk = cols
        tk_p = cols_p
    else:
        # Split K so tm can stay ~1024 regardless of A's width.
        tk = max(128, (usable // (1024 * 3 * itemsize)) // 128 * 128)
        if tk >= cols:
            tk = cols
        tk_p = _round_up(tk, 128)

    tm = usable // (3 * tk_p * itemsize + small_per_row)
    tm = max(8, (tm // 8) * 8)
    # Keep at least ~4 row tiles when rows allow: shards across both v7x
    # TensorCores and lets the pipeline overlap the next A DMA with compute.
    if rows_p8 > 8:
        tm = min(tm, max(8, _round_up(pl.cdiv(rows_p8, 4), 8)))
    tm = min(tm, rows_p8)
    return tm, tk, vmem_limit


# ---------------------------------------------------------------------------
# pallas_call wrapper
# ---------------------------------------------------------------------------
@functools.partial(jax.jit, static_argnums=(5, 6, 7))
def _gemv_pallas(alpha, beta, A, x_row, b, tm, tk, vmem_limit):
    rows, cols = A.shape
    ni = pl.cdiv(rows, tm)
    nk = pl.cdiv(cols, tk)
    k_valid_last = (cols - (nk - 1) * tk) if (cols % tk) else None

    kernel = functools.partial(_gemv_kernel, k_valid_last=k_valid_last)
    itemsize = A.dtype.itemsize

    cost = pl.CostEstimate(
        flops=2 * rows * cols,
        transcendentals=0,
        bytes_accessed=(rows * cols + cols + 2 * rows) * itemsize,
    )

    return pl.pallas_call(
        kernel,
        out_shape=jax.ShapeDtypeStruct((rows, 1), jnp.float32),
        grid_spec=pltpu.PrefetchScalarGridSpec(
            num_scalar_prefetch=0,
            grid=(ni, nk),
            in_specs=[
                pl.BlockSpec(memory_space=pltpu.MemorySpace.SMEM),    # alpha
                pl.BlockSpec(memory_space=pltpu.MemorySpace.SMEM),    # beta
                pl.BlockSpec((tm, tk), lambda i, k: (i, k)),          # A tile
                pl.BlockSpec((1, tk), lambda i, k: (0, k)),           # x row
                pl.BlockSpec((tm, 1), lambda i, k: (i, 0)),           # b tile
            ],
            out_specs=pl.BlockSpec((tm, 1), lambda i, k: (i, 0)),
            scratch_shapes=[pltpu.VMEM((tm, 1), jnp.float32)],        # acc
        ),
        compiler_params=pltpu.CompilerParams(
            dimension_semantics=("parallel", "arbitrary"),
            vmem_limit_bytes=vmem_limit,
        ),
        cost_estimate=cost,
    )(alpha, beta, A, x_row, b)


def gemv(alpha, beta, A, x, b, *, tm=None, tk=None):
    """y = alpha * A @ x + beta * b  (the module's cbon=False forward)."""
    rows, cols = A.shape
    assert x.shape == (cols, 1)
    assert b.shape == (rows, 1)
    assert alpha.shape == (1,) and beta.shape == (1,)

    tm_auto, tk_auto, vmem_limit = _choose_tiles(rows, cols, A.dtype.itemsize)
    tm = tm_auto if tm is None else tm
    tk = tk_auto if tk is None else tk

    # Lane-dense x: (1, cols) instead of the 1-lane (cols, 1) column vector.
    x_row = x.reshape(1, cols)
    return _gemv_pallas(alpha, beta, A, x_row, b, tm, tk, vmem_limit)


# ---------------------------------------------------------------------------
# Self-test
# ---------------------------------------------------------------------------
def _check(rows, cols, key, **tile_overrides):
    kA, kx, kb = jax.random.split(key, 3)
    A = jax.random.normal(kA, (rows, cols), dtype=jnp.float32)
    x = jax.random.normal(kx, (cols, 1), dtype=jnp.float32)
    b = jax.random.normal(kb, (rows, 1), dtype=jnp.float32)
    alpha = jnp.array([1.5], dtype=jnp.float32)
    beta = jnp.array([-0.75], dtype=jnp.float32)

    y = jax.block_until_ready(gemv(alpha, beta, A, x, b, **tile_overrides))
    y_ref = alpha * (A @ x) + beta * b
    assert y.shape == (rows, 1)
    assert jnp.allclose(y, y_ref, atol=1e-3, rtol=1e-3), (
        f"mismatch vs reference at shape ({rows}, {cols}) {tile_overrides}"
    )


if __name__ == "__main__":
    key = jax.random.PRNGKey(0)
    k1, k2, k3, k4, k5 = jax.random.split(key, 5)

    # Small shape matching the module spec.
    _check(128, 256, k1)
    # Multi-tile rows, exact division.
    _check(2048, 256, k2)
    # Ragged row count (partial trailing row tile).
    _check(1100, 256, k3)
    # Non-128-multiple cols, single full-width K tile.
    _check(64, 200, k4)
    # Forced K tiling with a ragged trailing K tile (exercises the mask path).
    _check(96, 200, k5, tk=128)

    print("KERNEL_OK")
</pallas_src>

<mosaic_0001>
module attributes {stable_mosaic.version = 11 : i64} {
  func.func @_gemv_kernel(%arg0: i32, %arg1: i32, %arg2: memref<1xf32, #tpu.memory_space<smem>>, %arg3: memref<1xf32, #tpu.memory_space<smem>>, %arg4: memref<32x256xf32, #tpu.memory_space<vmem>>, %arg5: memref<1x256xf32, #tpu.memory_space<vmem>>, %arg6: memref<32x1xf32, #tpu.memory_space<vmem>>, %arg7: memref<32x1xf32, #tpu.memory_space<vmem>>, %arg8: memref<32x1xf32, #tpu.memory_space<vmem>>) attributes {dimension_semantics = [#tpu.dimension_semantics<parallel>, #tpu.dimension_semantics<arbitrary>], iteration_bounds = array<i64: 4, 1>, scalar_prefetch = 0 : i64, scratch_operands = 1 : i64, tpu.core_type = #tpu.core_type<tc>, window_params = [{transform_indices = @transform_0, window_bounds = array<i64: 1>}, {transform_indices = @transform_1, window_bounds = array<i64: 1>}, {transform_indices = @transform_2, window_bounds = array<i64: 32, 256>}, {transform_indices = @transform_3, window_bounds = array<i64: 1, 256>}, {transform_indices = @transform_4, window_bounds = array<i64: 32, 1>}, {transform_indices = @transform_5, window_bounds = array<i64: 32, 1>}]} {
    %c0_i32 = arith.constant 0 : i32
    %0 = arith.cmpi eq, %arg1, %c0_i32 : i32
    %1 = arith.extui %0 : i1 to i32
    %c0_i32_0 = arith.constant 0 : i32
    %2 = arith.cmpi ne, %1, %c0_i32_0 : i32
    scf.if %2 {
      %cst_10 = arith.constant 0.000000e+00 : f32
      %15 = vector.broadcast %cst_10 : f32 to vector<32x1xf32>
      %c0_11 = arith.constant 0 : index
      %c0_12 = arith.constant 0 : index
      %16 = vector.load %arg8[%c0_11, %c0_12] : memref<32x1xf32, #tpu.memory_space<vmem>>, vector<32x1xf32>
      tpu.vector_store %arg8[%c0_11, %c0_12], %15 {strides = array<i32>} : memref<32x1xf32, #tpu.memory_space<vmem>>, vector<32x1xf32>,
    } else {
    }
    %c0 = arith.constant 0 : index
    %c0_1 = arith.constant 0 : index
    %3 = vector.load %arg4[%c0, %c0_1] : memref<32x256xf32, #tpu.memory_space<vmem>>, vector<32x256xf32>
    %c0_2 = arith.constant 0 : index
    %c0_3 = arith.constant 0 : index
    %4 = vector.load %arg5[%c0_2, %c0_3] : memref<1x256xf32, #tpu.memory_space<vmem>>, vector<1x256xf32>
    %5 = vector.broadcast %4 : vector<1x256xf32> to vector<32x256xf32>
    %6 = arith.mulf %3, %5 : vector<32x256xf32>
    %c0_4 = arith.constant 0 : index
    %c0_5 = arith.constant 0 : index
    %7 = vector.load %arg8[%c0_4, %c0_5] : memref<32x1xf32, #tpu.memory_space<vmem>>, vector<32x1xf32>
    %cst = arith.constant dense<0.000000e+00> : vector<32xf32>
    %8 = vector.multi_reduction <add>, %6, %cst [1] : vector<32x256xf32> to vector<32xf32>
    %9 = vector.shape_cast %8 : vector<32xf32> to vector<32x1xf32>
    %10 = arith.addf %7, %9 : vector<32x1xf32>
    %c0_6 = arith.constant 0 : index
    %c0_7 = arith.constant 0 : index
    %11 = vector.load %arg8[%c0_6, %c0_7] : memref<32x1xf32, #tpu.memory_space<vmem>>, vector<32x1xf32>
    tpu.vector_store %arg8[%c0_6, %c0_7], %10 {strides = array<i32>} : memref<32x1xf32, #tpu.memory_space<vmem>>, vector<32x1xf32>,
    %c0_i32_8 = arith.constant 0 : i32
    %12 = arith.cmpi eq, %arg1, %c0_i32_8 : i32
    %13 = arith.extui %12 : i1 to i32
    %c0_i32_9 = arith.constant 0 : i32
    %14 = arith.cmpi ne, %13, %c0_i32_9 : i32
    scf.if %14 {
      %c0_10 = arith.constant 0 : index
      %15 = memref.load %arg2[%c0_10] : memref<1xf32, #tpu.memory_space<smem>>
      %c0_11 = arith.constant 0 : index
      %c0_12 = arith.constant 0 : index
      %16 = vector.load %arg8[%c0_11, %c0_12] : memref<32x1xf32, #tpu.memory_space<vmem>>, vector<32x1xf32>
      %17 = vector.broadcast %15 : f32 to vector<32x1xf32>
      %18 = arith.mulf %17, %16 : vector<32x1xf32>
      %c0_13 = arith.constant 0 : index
      %19 = memref.load %arg3[%c0_13] : memref<1xf32, #tpu.memory_space<smem>>
      %c0_14 = arith.constant 0 : index
      %c0_15 = arith.constant 0 : index
      %20 = vector.load %arg6[%c0_14, %c0_15] : memref<32x1xf32, #tpu.memory_space<vmem>>, vector<32x1xf32>
      %21 = vector.broadcast %19 : f32 to vector<32x1xf32>
      %22 = arith.mulf %21, %20 : vector<32x1xf32>
      %23 = arith.addf %18, %22 : vector<32x1xf32>
      %c0_16 = arith.constant 0 : index
      %c0_17 = arith.constant 0 : index
      %24 = vector.load %arg7[%c0_16, %c0_17] : memref<32x1xf32, #tpu.memory_space<vmem>>, vector<32x1xf32>
      tpu.vector_store %arg7[%c0_16, %c0_17], %23 {strides = array<i32>} : memref<32x1xf32, #tpu.memory_space<vmem>>, vector<32x1xf32>,
    } else {
    }
    return
  }
  func.func @transform_0(%arg0: i32, %arg1: i32) -> i32 {
    %c0_i32 = arith.constant 0 : i32
    %c0_i32_0 = arith.constant 0 : i32
    return %c0_i32 : i32
  }
  func.func @transform_1(%arg0: i32, %arg1: i32) -> i32 {
    %c0_i32 = arith.constant 0 : i32
    %c0_i32_0 = arith.constant 0 : i32
    return %c0_i32 : i32
  }
  func.func @transform_2(%arg0: i32, %arg1: i32) -> (i32, i32) {
    %c0_i32 = arith.constant 0 : i32
    return %arg0, %arg1 : i32, i32
  }
  func.func @transform_3(%arg0: i32, %arg1: i32) -> (i32, i32) {
    %c0_i32 = arith.constant 0 : i32
    %c0_i32_0 = arith.constant 0 : i32
    return %c0_i32, %arg1 : i32, i32
  }
  func.func @transform_4(%arg0: i32, %arg1: i32) -> (i32, i32) {
    %c0_i32 = arith.constant 0 : i32
    %c0_i32_0 = arith.constant 0 : i32
    return %arg0, %c0_i32 : i32, i32
  }
  func.func @transform_5(%arg0: i32, %arg1: i32) -> (i32, i32) {
    %c0_i32 = arith.constant 0 : i32
    %c0_i32_0 = arith.constant 0 : i32
    return %arg0, %c0_i32 : i32, i32
  }
}

</mosaic_0001>

<llo_original>
// kernel: _gemv_pallas.1
$region0: #{_gemv_pallas.1}
  #allocation0 [shape = 'u32[]', space=smem, size = 0x4, offset = 0x4, fixed_abs, tag = 'smem constant byte address 0x4 - core index']
  #allocation1 [shape = 'u32[144,128]{1,0:T(1,128)}', space=vmem, size = 0x12000, scoped, tag = 'internal scratch']
  #allocation2 [shape = 'f32[32,1]{1,0:T(8,128)}', space=vmem, size = 0x4000, scoped, tag = 'scratch operand']
  #allocation3 [shape = 'f32[1]{0:T(128)S(6)}', space=smem, size = 0x200, scoped, tag = 'scoped memory for _gemv_pallas.1']
  #allocation4 [shape = 'f32[1]{0:T(128)S(6)}', space=smem, size = 0x200, scoped, tag = 'scoped memory for _gemv_pallas.1']
  %s0 = inlined_call_operand.<no memory space> [shape: f32[1], index: 0, kind: input, shape index: {}]
  %s1 = inlined_call_operand.<no memory space> [shape: f32[1], index: 1, kind: input, shape index: {}]
  %s2 = inlined_call_operand.hbm [shape: f32[128,256], index: 2, kind: input, shape index: {}]
  %s3 = inlined_call_operand.vmem [shape: f32[1,256], index: 3, kind: input, shape index: {}]
  %s4 = inlined_call_operand.vmem [shape: f32[128,1], index: 4, kind: input, shape index: {}]
  %s5 = inlined_call_operand.vmem [shape: f32[128,1], index: 5, kind: output, shape index: {}]
  %s6 = sld [smem:[#allocation0]]
  $region65: #{_gemv_pallas.1} parent=0
    _
  %s8 = ssub.s32 1, %s6
  %s9 = scalar_select 0, %s8, %s6
  %10 = sst [smem:[#allocation3]] %s0
  %11 = sst [smem:[#allocation4]] %s1
  $region1: #{_gemv_pallas.1} parent=0
    #allocation5 [shape = 'u8[65536]{0}', space=vmem, size = 0x10000, scoped, tag = 'input window, operand 2']
    #allocation6 [shape = 's32[2]{0}', space=sflag, size = 0x8, scoped, tag = 'scoped memory for _gemv_pallas.1']
    %12 = vsyncpa [#allocation6], 0
    %s13 = scalar_lea.sflag [#allocation6], 1
    %14 = vsyncpa %s13, 0
    loop: start=0, step=1, limit=6
    $region2: #{_gemv_pallas.1} parent=1 // loop_pre_header
      _
    $region3: #{_gemv_pallas.1} parent=1 // loop_header
      %s16 = sphi 0, %s20
      %p17 = scmp.ge.s32.totalorder %s16, 6
      %s23 = sphi 0, %s35
      %s24 = sphi 0, %s31
      %s25 = sphi 0, %s23
      %s26 = sphi 0, %s24
      %s27 = sphi 0, %s25
      %s28 = sphi 0, %s26
      %s36 = sphi 0, %s36
      %s38 = sphi 0, %s36
      %s39 = sphi 0, %s38
      %s53 = sphi 0, %s39
      %s57 = sphi 0, %s57
      %s59 = sphi 0, %s57
      %s60 = sphi 0, %s59
      %s74 = sphi 0, %s60
      %s82 = sphi 0, %s84
      %s85 = sphi 0, %s82
      %s86 = sphi 0, %s85
      %s102 = sphi 0, %s86
      %s108 = sphi 0, %s110
      %s111 = sphi 0, %s108
      %s112 = sphi 0, %s111
      %s128 = sphi 0, %s112
      %s134 = sphi 0, %s136
      %s137 = sphi 0, %s134
      %s138 = sphi 0, %s137
      %s154 = sphi 0, %s138
      %s160 = sphi 0, %s162
      %s163 = sphi 0, %s160
      %s164 = sphi 0, %s163
      %s180 = sphi 0, %s164
    $region4: #{_gemv_pallas.1} parent=1 // loop_header_branch
      %19 = sbr.rel (%p17) target = $region8
    $region5: #{_gemv_pallas.1} parent=1 // loop_body
      %s21 = ssub.s32 %s16, 1
      %s22 = ssub.s32 %s16, 2
      %s29 = sadd.s32 1, %s24
      %p30 = scmp.ge.s32.totalorder %s29, 1
      %s31 = scalar_select %p30, 0, %s29
      %s32 = sadd.s32 1, %s23
      %s33 = scalar_select %p30, %s32, %s23
      %p34 = scmp.ge.s32.totalorder %s33, 4
      %s35 = scalar_select %p34, 0, %s33
      %s37 = sadd.s32 %s36, 1
      %p40 = scmp.eq.s32.totalorder %s16, 3
      %p41 = scmp.ne.s32.totalorder %s36, %s38
      %p42 = scmp.eq.s32.totalorder %s16, 0
      %p43 = por %p41, %p42
      %p44 = scmp.ne.s32.totalorder %s36, %s38
      %p45 = scmp.eq.s32.totalorder %s21, 3
      %p46 = por %p44, %p45
      %p47 = scmp.ne.s32.totalorder %s38, %s39
      %p48 = scmp.eq.s32.totalorder %s21, 0
      %p49 = por %p47, %p48
      %p50 = scmp.ne.s32.totalorder %s38, %s39
      %p51 = scmp.eq.s32.totalorder %s22, 3
      %p52 = por %p50, %p51
      %p54 = scmp.ne.s32.totalorder %s39, %s53
      %p55 = scmp.eq.s32.totalorder %s22, 0
      %p56 = por %p54, %p55
      %s58 = sadd.s32 %s57, 1
      %p61 = scmp.eq.s32.totalorder %s16, 3
      %p62 = scmp.ne.s32.totalorder %s57, %s59
      %p63 = scmp.eq.s32.totalorder %s16, 0
      %p64 = por %p62, %p63
      %p65 = scmp.ne.s32.totalorder %s57, %s59
      %p66 = scmp.eq.s32.totalorder %s21, 3
      %p67 = por %p65, %p66
      %p68 = scmp.ne.s32.totalorder %s59, %s60
      %p69 = scmp.eq.s32.totalorder %s21, 0
      %p70 = por %p68, %p69
      %p71 = scmp.ne.s32.totalorder %s59, %s60
      %p72 = scmp.eq.s32.totalorder %s22, 3
      %p73 = por %p71, %p72
      %p75 = scmp.ne.s32.totalorder %s60, %s74
      %p76 = scmp.eq.s32.totalorder %s22, 0
      %p77 = por %p75, %p76
      %s78 = ssub.s32 %s23, %s35
      %s79 = ssub.s32 %s24, %s31
      %s80 = sor.u32 %s78, %s79
      %p81 = scmp.eq.s32.totalorder %s80, 0
      %s83 = sadd.s32 %s82, 1
      %s84 = scalar_select %p81, %s82, %s83
      %p87 = pneg %p81
      %p88 = scmp.eq.s32.totalorder %s16, 3
      %p89 = por %p87, %p88
      %p90 = scmp.ne.s32.totalorder %s82, %s85
      %p91 = scmp.eq.s32.totalorder %s16, 0
      %p92 = por %p90, %p91
      %p93 = scmp.ne.s32.totalorder %s82, %s85
      %p94 = scmp.eq.s32.totalorder %s21, 3
      %p95 = por %p93, %p94
      %p96 = scmp.ne.s32.totalorder %s85, %s86
      %p97 = scmp.eq.s32.totalorder %s21, 0
      %p98 = por %p96, %p97
      %p99 = scmp.ne.s32.totalorder %s85, %s86
      %p100 = scmp.eq.s32.totalorder %s22, 3
      %p101 = por %p99, %p100
      %p103 = scmp.ne.s32.totalorder %s86, %s102
      %p104 = scmp.eq.s32.totalorder %s22, 0
      %p105 = por %p103, %p104
      %s106 = ssub.s32 %s24, %s31
      %p107 = scmp.eq.s32.totalorder %s106, 0
      %s109 = sadd.s32 %s108, 1
      %s110 = scalar_select %p107, %s108, %s109
      %p113 = pneg %p107
      %p114 = scmp.eq.s32.totalorder %s16, 3
      %p115 = por %p113, %p114
      %p116 = scmp.ne.s32.totalorder %s108, %s111
      %p117 = scmp.eq.s32.totalorder %s16, 0
      %p118 = por %p116, %p117
      %p119 = scmp.ne.s32.totalorder %s108, %s111
      %p120 = scmp.eq.s32.totalorder %s21, 3
      %p121 = por %p119, %p120
      %p122 = scmp.ne.s32.totalorder %s111, %s112
      %p123 = scmp.eq.s32.totalorder %s21, 0
      %p124 = por %p122, %p123
      %p125 = scmp.ne.s32.totalorder %s111, %s112
      %p126 = scmp.eq.s32.totalorder %s22, 3
      %p127 = por %p125, %p126
      %p129 = scmp.ne.s32.totalorder %s112, %s128
      %p130 = scmp.eq.s32.totalorder %s22, 0
      %p131 = por %p129, %p130
      %s132 = ssub.s32 %s23, %s35
      %p133 = scmp.eq.s32.totalorder %s132, 0
      %s135 = sadd.s32 %s134, 1
      %s136 = scalar_select %p133, %s134, %s135
      %p139 = pneg %p133
      %p140 = scmp.eq.s32.totalorder %s16, 3
      %p141 = por %p139, %p140
      %p142 = scmp.ne.s32.totalorder %s134, %s137
      %p143 = scmp.eq.s32.totalorder %s16, 0
      %p144 = por %p142, %p143
      %p145 = scmp.ne.s32.totalorder %s134, %s137
      %p146 = scmp.eq.s32.totalorder %s21, 3
      %p147 = por %p145, %p146
      %p148 = scmp.ne.s32.totalorder %s137, %s138
      %p149 = scmp.eq.s32.totalorder %s21, 0
      %p150 = por %p148, %p149
      %p151 = scmp.ne.s32.totalorder %s137, %s138
      %p152 = scmp.eq.s32.totalorder %s22, 3
      %p153 = por %p151, %p152
      %p155 = scmp.ne.s32.totalorder %s138, %s154
      %p156 = scmp.eq.s32.totalorder %s22, 0
      %p157 = por %p155, %p156
      %s158 = ssub.s32 %s23, %s35
      %p159 = scmp.eq.s32.totalorder %s158, 0
      %s161 = sadd.s32 %s160, 1
      %s162 = scalar_select %p159, %s160, %s161
      %p165 = pneg %p159
      %p166 = scmp.eq.s32.totalorder %s16, 3
      %p167 = por %p165, %p166
      %p168 = scmp.ne.s32.totalorder %s160, %s163
      %p169 = scmp.eq.s32.totalorder %s16, 0
      %p170 = por %p168, %p169
      %p171 = scmp.ne.s32.totalorder %s160, %s163
      %p172 = scmp.eq.s32.totalorder %s21, 3
      %p173 = por %p171, %p172
      %p174 = scmp.ne.s32.totalorder %s163, %s164
      %p175 = scmp.eq.s32.totalorder %s21, 0
      %p176 = por %p174, %p175
      %p177 = scmp.ne.s32.totalorder %s163, %s164
      %p178 = scmp.eq.s32.totalorder %s22, 3
      %p179 = por %p177, %p178
      %p181 = scmp.ne.s32.totalorder %s164, %s180
      %p182 = scmp.eq.s32.totalorder %s22, 0
      %p183 = por %p181, %p182
      %p184 = scmp.le.s32.totalorder 1, %s16
      %p185 = scmp.lt.s32.totalorder %s16, 5
      %p186 = pnand %p184, %p185
      %p187 = pneg %p186
      // Predicated region
      $region9: #{_gemv_pallas.1} parent=5 // pred_check
        _
      $region10: #{_gemv_pallas.1} parent=5 // pred_check_branch
        %189 = sbr.rel (%p186) target = $region12
      $region11: #{_gemv_pallas.1} parent=5 // pred_region
        %s190 = ssub.s32 %s16, 1
        // Predicated region
        $region13: #{_gemv_pallas.1} parent=11 // pred_check
          %p191 = pneg %p49
        $region14: #{_gemv_pallas.1} parent=11 // pred_check_branch
          %193 = sbr.rel (%p191) target = $region16
        $region15: #{_gemv_pallas.1} parent=11 // pred_region
          _
        $region16: #{_gemv_pallas.1} parent=11 // pred_fallthru
          _
        // Predicated region
        $region17: #{_gemv_pallas.1} parent=11 // pred_check
          %p194 = pneg %p70
        $region18: #{_gemv_pallas.1} parent=11 // pred_check_branch
          %196 = sbr.rel (%p194) target = $region20
        $region19: #{_gemv_pallas.1} parent=11 // pred_region
          _
        $region20: #{_gemv_pallas.1} parent=11 // pred_fallthru
          _
        // Predicated region
        $region21: #{_gemv_pallas.1} parent=11 // pred_check
          %p197 = pneg %p124
        $region22: #{_gemv_pallas.1} parent=11 // pred_check_branch
          %199 = sbr.rel (%p197) target = $region24
        $region23: #{_gemv_pallas.1} parent=11 // pred_region
          %s200 = smul.u32 2, %s26
          %p201 = scmp.lt.s32.totalorder %s200, 1
          %s202 = scalar_select %p201, %s200, 1
          %s203 = scalar_lea.vmem %s3, %s202
          %s204 = smul.u32 2, %s26
        $region24: #{_gemv_pallas.1} parent=11 // pred_fallthru
          _
      $region12: #{_gemv_pallas.1} parent=5 // pred_fallthru
        _
      %p205 = scmp.lt.s32.totalorder %s16, 4
      // Predicated region
      $region25: #{_gemv_pallas.1} parent=5 // pred_check
        %p206 = pneg %p205
      $region26: #{_gemv_pallas.1} parent=5 // pred_check_branch
        %208 = sbr.rel (%p206) target = $region28
      $region27: #{_gemv_pallas.1} parent=5 // pred_region
        // Predicated region
        $region29: #{_gemv_pallas.1} parent=27 // pred_check
          %p209 = pneg %p92
        $region30: #{_gemv_pallas.1} parent=27 // pred_check_branch
          %211 = sbr.rel (%p209) target = $region32
        $region31: #{_gemv_pallas.1} parent=27 // pred_region
          %s212 = sand.u32 %s82, 1
          %s213 = scalar_lea.sflag [#allocation6], %s212
          %s214 = sand.u32 %s82, 1
          %s215 = smul.addr %s214, 64
          %s216 = scalar_lea.vmem [#allocation5], %s215
          %s217 = smul.u32 4, %s23
          %s218 = smul.u32 2, %s24
          %s220 = ssub.s32 1024, 1024
          %221 = vsyncadd %s213, %s220
          %s222 = smul.addr %s217, 2
          %s223 = sadd.s32 %s218, %s222
          %s224 = smul.addr %s223, 128
          %s225 = scalar_lea.hbm %s2, %s224
          %s226 = sshll.u32 %s216, 4
          %s227 = int_to_ptr.vmem [resolvable:$true] %s226
          %232 = dma.hbm_to_vmem [thread:$0]  %s225, 1024, %s227, %s213, 256, 256, 16
        $region32: #{_gemv_pallas.1} parent=27 // pred_fallthru
          _
        // Predicated region
        $region33: #{_gemv_pallas.1} parent=27 // pred_check
          %p233 = pneg %p144
        $region34: #{_gemv_pallas.1} parent=27 // pred_check_branch
          %235 = sbr.rel (%p233) target = $region36
        $region35: #{_gemv_pallas.1} parent=27 // pred_region
          %s236 = smul.u32 4, %s23
          %p237 = scmp.lt.s32.totalorder %s236, 15
          %s238 = scalar_select %p237, %s236, 15
          %s239 = smul.addr %s238, 8
          %s240 = scalar_lea.vmem %s4, %s239
          %s241 = smul.u32 4, %s23
        $region36: #{_gemv_pallas.1} parent=27 // pred_fallthru
          _
      $region28: #{_gemv_pallas.1} parent=5 // pred_fallthru
        _
      %p242 = scmp.le.s32.totalorder 1, %s16
      %p243 = scmp.lt.s32.totalorder %s16, 5
      %p244 = pnand %p242, %p243
      %p245 = pneg %p244
      // Predicated region
      $region37: #{_gemv_pallas.1} parent=5 // pred_check
        _
      $region38: #{_gemv_pallas.1} parent=5 // pred_check_branch
        %247 = sbr.rel (%p244) target = $region40
      $region39: #{_gemv_pallas.1} parent=5 // pred_region
        %s248 = ssub.s32 %s16, 1
        %s249 = sand.u32 %s85, 1
        %s250 = scalar_lea.sflag [#allocation6], %s249
        %s251 = sand.u32 %s85, 1
        %s252 = smul.addr %s251, 64
        %s253 = scalar_lea.vmem [#allocation5], %s252
        // Predicated region
        $region41: #{_gemv_pallas.1} parent=39 // pred_check
          %p254 = pneg %p98
        $region42: #{_gemv_pallas.1} parent=39 // pred_check_branch
          %256 = sbr.rel (%p254) target = $region44
        $region43: #{_gemv_pallas.1} parent=39 // pred_region
          %257 = dma.done %s250, 1024
        $region44: #{_gemv_pallas.1} parent=39 // pred_fallthru
          _
        %p258 = pneg %p49
        %p259 = pneg %p46
        %p260 = pneg %p70
        %p261 = pneg %p67
        %s262 = sand.u32 %s85, 1
        %s263 = scalar_lea.sflag [#allocation6], %s262
        %s264 = sand.u32 %s85, 1
        %s265 = smul.addr %s264, 64
        %s266 = scalar_lea.vmem [#allocation5], %s265
        %p267 = pneg %p98
        %p268 = pneg %p95
        %s269 = smul.u32 2, %s26
        %p270 = scmp.lt.s32.totalorder %s269, 1
        %s271 = scalar_select %p270, %s269, 1
        %s272 = scalar_lea.vmem %s3, %s271
        %p273 = pneg %p124
        %p274 = pneg %p121
        %s275 = smul.u32 4, %s25
        %p276 = scmp.lt.s32.totalorder %s275, 15
        %s277 = scalar_select %p276, %s275, 15
        %s278 = smul.addr %s277, 8
        %s279 = scalar_lea.vmem %s4, %s278
        %p280 = pneg %p150
        %p281 = pneg %p147
        %p282 = pneg %p176
        %p283 = pneg %p173
        %s284 = smul.u32 4, %s25
        %p285 = scmp.lt.s32.totalorder %s284, 15
        %s286 = scalar_select %p285, %s284, 15
        %s287 = smul.addr %s286, 8
        %s288 = scalar_lea.vmem %s5, %s287
        %s289 = smul.u32 4, %s25
        %s290 = smul.u32 2, %s26
        %s291 = smul.u32 2, %s26
        %p292 = scmp.lt.s32.totalorder %s291, 1
        %s293 = scalar_select %p292, %s291, 1
        %s294 = scalar_lea.vmem %s3, %s293
        %s295 = smul.u32 2, %s26
        %s296 = smul.u32 4, %s25
        %p297 = scmp.lt.s32.totalorder %s296, 15
        %s298 = scalar_select %p297, %s296, 15
        %s299 = smul.addr %s298, 8
        %s300 = scalar_lea.vmem %s4, %s299
        %s301 = smul.u32 4, %s25
        %s302 = smul.u32 4, %s25
        %p303 = scmp.lt.s32.totalorder %s302, 15
        %s304 = scalar_select %p303, %s302, 15
        %s305 = smul.addr %s304, 8
        %s306 = scalar_lea.vmem %s5, %s305
        %s307 = smul.u32 4, %s25
        %p308 = scmp.eq.s32.totalorder %s26, 0
        // Predicated region
        $region45: #{_gemv_pallas.1} parent=39 // pred_check
          %p309 = pneg %p308
        $region46: #{_gemv_pallas.1} parent=39 // pred_check_branch
          %311 = sbr.rel (%p309) target = $region48
        $region47: #{_gemv_pallas.1} parent=39 // pred_region
          %vm312 = vcmask 7168
          %313 = vst.msk [vmem:[#allocation2] sm:$0xff] %vm312, 0.0
          %314 = vst.msk [vmem:[#allocation2 + $0x8] sm:$0xff] %vm312, 0.0
          %315 = vst.msk [vmem:[#allocation2 + $0x10] sm:$0xff] %vm312, 0.0
          %316 = vst.msk [vmem:[#allocation2 + $0x18] sm:$0xff] %vm312, 0.0
        $region48: #{_gemv_pallas.1} parent=39 // pred_fallthru
          _
        %v317 = vld [vmem:[%s253] sm:$0xff]
        %v318 = vld [vmem:[%s253 + $0x8] sm:$0xff]
        %v319 = vld [vmem:[%s253 + $0x10] sm:$0xff]
        %v320 = vld [vmem:[%s253 + $0x18] sm:$0xff]
        %v321 = vld [vmem:[%s253 + $0x20] sm:$0xff]
        %v322 = vld [vmem:[%s253 + $0x28] sm:$0xff]
        %v323 = vld [vmem:[%s253 + $0x30] sm:$0xff]
        %v324 = vld [vmem:[%s253 + $0x38] sm:$0xff]
        %v325 = vld [vmem:[%s294] sm:$0x3]
        %v327 = vlaneseq
        %v328 = vshrl.u32 %v327, 7
        %v329 = vsub.s32 0, %v328
        %v330 = vrot.slane %v325, %v329
        %v331 = vlaneseq
        %v332 = vshrl.u32 %v331, 7
        %v333 = vsub.s32 1, %v332
        %v334 = vrot.slane %v325, %v333
        %v337 = vmul.f32 %v317, %v330
        %v338 = vmul.f32 %v318, %v334
        %v339 = vmul.f32 %v319, %v330
        %v340 = vmul.f32 %v320, %v334
        %v341 = vmul.f32 %v321, %v330
        %v342 = vmul.f32 %v322, %v334
        %v343 = vmul.f32 %v323, %v330
        %v344 = vmul.f32 %v324, %v334
        %v345 = vld [vmem:[#allocation2] sm:$0xff]
        %v346 = vld [vmem:[#allocation2 + $0x8] sm:$0xff]
        %v347 = vld [vmem:[#allocation2 + $0x10] sm:$0xff]
        %v348 = vld [vmem:[#allocation2 + $0x18] sm:$0xff]
        %v349 = vadd.f32 %v337, %v338
        %350 = vadd.xlane.f32.xlu0 %v349
        %v351 = vpop.xlane.xlu0 %350
        %v352 = vadd.f32 %v339, %v340
        %353 = vadd.xlane.f32.xlu0 %v352
        %v354 = vpop.xlane.xlu0 %353
        %v355 = vadd.f32 %v341, %v342
        %356 = vadd.xlane.f32.xlu0 %v355
        %v357 = vpop.xlane.xlu0 %356
        %v358 = vadd.f32 %v343, %v344
        %359 = vadd.xlane.f32.xlu0 %v358
        %v360 = vpop.xlane.xlu0 %359
        %v361 = vadd.f32 %v345, %v351
        %v362 = vadd.f32 %v346, %v354
        %v363 = vadd.f32 %v347, %v357
        %v364 = vadd.f32 %v348, %v360
        %vm365 = vcmask 7168
        %366 = vst.msk [vmem:[#allocation2] sm:$0xff] %vm365, %v361
        %367 = vst.msk [vmem:[#allocation2 + $0x8] sm:$0xff] %vm365, %v362
        %368 = vst.msk [vmem:[#allocation2 + $0x10] sm:$0xff] %vm365, %v363
        %369 = vst.msk [vmem:[#allocation2 + $0x18] sm:$0xff] %vm365, %v364
        // Predicated region
        $region49: #{_gemv_pallas.1} parent=39 // pred_check
          %p370 = pneg %p308
        $region50: #{_gemv_pallas.1} parent=39 // pred_check_branch
          %372 = sbr.rel (%p370) target = $region52
        $region51: #{_gemv_pallas.1} parent=39 // pred_region
          %s373 = sld [smem:[#allocation3]]
          %v374 = vld [vmem:[#allocation2] sm:$0xff]
          %v375 = vld [vmem:[#allocation2 + $0x8] sm:$0xff]
          %v376 = vld [vmem:[#allocation2 + $0x10] sm:$0xff]
          %v377 = vld [vmem:[#allocation2 + $0x18] sm:$0xff]
          %v378 = vstv %s373
          %v379 = vmul.f32 %v378, %v374
          %v380 = vmul.f32 %v378, %v375
          %v381 = vmul.f32 %v378, %v376
          %v382 = vmul.f32 %v378, %v377
          %s383 = sld [smem:[#allocation4]]
          %v384 = vld [vmem:[%s300] sm:$0xff]
          %v385 = vld [vmem:[%s300 + $0x8] sm:$0xff]
          %v386 = vld [vmem:[%s300 + $0x10] sm:$0xff]
          %v387 = vld [vmem:[%s300 + $0x18] sm:$0xff]
          %v388 = vstv %s383
          %v389 = vmul.f32 %v388, %v384
          %v390 = vmul.f32 %v388, %v385
          %v391 = vmul.f32 %v388, %v386
          %v392 = vmul.f32 %v388, %v387
          %v393 = vadd.f32 %v379, %v389
          %v394 = vadd.f32 %v380, %v390
          %v395 = vadd.f32 %v381, %v391
          %v396 = vadd.f32 %v382, %v392
          %397 = vst.msk [vmem:[%s306] sm:$0xff] %vm365, %v393
          %398 = vst.msk [vmem:[%s306 + $0x8] sm:$0xff] %vm365, %v394
          %399 = vst.msk [vmem:[%s306 + $0x10] sm:$0xff] %vm365, %v395
          %400 = vst.msk [vmem:[%s306 + $0x18] sm:$0xff] %vm365, %v396
        $region52: #{_gemv_pallas.1} parent=39 // pred_fallthru
          _
        %s401 = smul.u32 4, %s25
        %p402 = scmp.lt.s32.totalorder %s401, 15
        %s403 = scalar_select %p402, %s401, 15
        %s404 = smul.addr %s403, 8
        %s405 = scalar_lea.vmem %s5, %s404
        // Predicated region
        $region53: #{_gemv_pallas.1} parent=39 // pred_check
          %p406 = pneg %p173
        $region54: #{_gemv_pallas.1} parent=39 // pred_check_branch
          %408 = sbr.rel (%p406) target = $region56
        $region55: #{_gemv_pallas.1} parent=39 // pred_region
          %s409 = smul.u32 4, %s25
        $region56: #{_gemv_pallas.1} parent=39 // pred_fallthru
          _
      $region40: #{_gemv_pallas.1} parent=5 // pred_fallthru
        _
      %p410 = scmp.le.s32.totalorder 2, %s16
      // Predicated region
      $region57: #{_gemv_pallas.1} parent=5 // pred_check
        %p411 = pneg %p410
      $region58: #{_gemv_pallas.1} parent=5 // pred_check_branch
        %413 = sbr.rel (%p411) target = $region60
      $region59: #{_gemv_pallas.1} parent=5 // pred_region
        %s414 = ssub.s32 %s16, 2
        // Predicated region
        $region61: #{_gemv_pallas.1} parent=59 // pred_check
          %p415 = pneg %p179
        $region62: #{_gemv_pallas.1} parent=59 // pred_check_branch
          %417 = sbr.rel (%p415) target = $region64
        $region63: #{_gemv_pallas.1} parent=59 // pred_region
          %s418 = smul.u32 4, %s27
          %p419 = scmp.lt.s32.totalorder %s418, 15
          %s420 = scalar_select %p419, %s418, 15
          %s421 = smul.addr %s420, 8
          %s422 = scalar_lea.vmem %s5, %s421
        $region64: #{_gemv_pallas.1} parent=59 // pred_fallthru
          _
      $region60: #{_gemv_pallas.1} parent=5 // pred_fallthru
        _
    $region6: #{_gemv_pallas.1} parent=1 // loop_footer
      %s20 = sadd.s32 1, %s16
    $region7: #{_gemv_pallas.1} parent=1 // loop_footer_branch
      %15 = sbr.rel target = $region3
    $region8: #{_gemv_pallas.1} parent=1 // loop_exit
      _
    %423 = vsyncpa [#allocation6], 1
    %s424 = scalar_lea.sflag [#allocation6], 1
    %425 = vsyncpa %s424, 1

</llo_original>
